<compile_context>
chip_gen: v5e
topology: v5e:2x2
jax: 0.10.0
libtpu: 0.0.40
codegen_flags: <defaults>
</compile_context>

<pallas_src>
import jax
import jax.numpy as jnp
from jax.experimental import pallas as pl
from jax.experimental.pallas import tpu as pltpu


def _log_softmax_kernel(x_ref, o_ref):
    """Numerically-stable log_softmax along the last (lane) axis of the block."""
    x = x_ref[...].astype(jnp.float32)   # no-op for f32; f32 accumulation for bf16
    m = jnp.max(x, axis=-1, keepdims=True)
    shifted = x - m
    lse = jnp.log(jnp.sum(jnp.exp(shifted), axis=-1, keepdims=True))
    o_ref[...] = (shifted - lse).astype(o_ref.dtype)


_LANE = 128
_TARGET_BLOCK_BYTES = 2 * 1024 * 1024   # ~2 MiB/block: DMA-efficiency plateau,
                                        # safe within v5e 16 MiB / v7x 32 MiB scoped VMEM
                                        # even with in+out double buffering.


def _choose_batch_tile(B, C, itemsize):
    # Sublane packing granularity: f32 -> 8 rows, bf16 -> 16, int8/fp8 -> 32.
    sub = max(8, 32 // max(1, itemsize))
    tb = _TARGET_BLOCK_BYTES // max(1, C * itemsize)
    tb = (tb // sub) * sub
    tb = max(sub, min(1024, tb))
    if tb >= B:
        return B                         # single block over batch (== full dim, legal)
    return tb


def class_classifier_forward(x):
    """Equivalent of Class_Classifier.forward: F.log_softmax(x, dim=1).

    x: (batch, num_classes) array. Returns array of same shape/dtype.
    """
    assert x.ndim == 2, "expected (batch, num_classes) input"
    B, C = x.shape
    orig_C = C

    # Lane-dense stores: pad a narrow class axis up to one full vreg lane row.
    if C < _LANE:
        x = jnp.pad(x, ((0, 0), (0, _LANE - C)), constant_values=-jnp.inf)
        C = _LANE

    itemsize = jnp.dtype(x.dtype).itemsize
    tb = _choose_batch_tile(B, C, itemsize)
    grid = (pl.cdiv(B, tb),)

    out = pl.pallas_call(
        _log_softmax_kernel,
        out_shape=jax.ShapeDtypeStruct((B, C), x.dtype),
        grid=grid,
        in_specs=[pl.BlockSpec((tb, C), lambda i: (i, 0))],
        out_specs=pl.BlockSpec((tb, C), lambda i: (i, 0)),
        compiler_params=pltpu.CompilerParams(
            dimension_semantics=("parallel",),
        ),
        cost_estimate=pl.CostEstimate(
            flops=5 * B * C,
            transcendentals=B * C,
            bytes_accessed=2 * B * C * itemsize,
        ),
    )(x)

    if orig_C != C:
        out = out[:, :orig_C]
    return out


if __name__ == "__main__":
    key = jax.random.PRNGKey(0)

    # Class_Classifier has no parameters; input is (batch, num_classes) logits.
    batch, num_classes = 2, 16
    x = jax.random.normal(key, (batch, num_classes), dtype=jnp.float32)

    out = class_classifier_forward(x)
    out = jax.block_until_ready(out)

    ref = jax.nn.log_softmax(x, axis=1)
    assert out.shape == x.shape and out.dtype == x.dtype
    assert jnp.allclose(out, ref, atol=1e-5, rtol=1e-5), "mismatch vs reference"

    # Secondary check: exercises the batch-tiled, multi-block path (including a
    # partial tail block) with a lane-dense class axis (C >= 128).
    k2 = jax.random.PRNGKey(0)
    x2 = jax.random.normal(k2, (2056, 256), dtype=jnp.float32)
    out2 = jax.block_until_ready(class_classifier_forward(x2))
    ref2 = jax.nn.log_softmax(x2, axis=1)
    assert jnp.allclose(out2, ref2, atol=1e-5, rtol=1e-5), "mismatch vs reference (tiled)"

    print("KERNEL_OK")
</pallas_src>

<mosaic_0001>
module attributes {stable_mosaic.version = 11 : i64} {
  func.func @_log_softmax_kernel(%arg0: i32, %arg1: memref<2x128xf32, #tpu.memory_space<vmem>>, %arg2: memref<2x128xf32, #tpu.memory_space<vmem>>) attributes {dimension_semantics = [#tpu.dimension_semantics<parallel>], iteration_bounds = array<i64: 1>, scalar_prefetch = 0 : i64, scratch_operands = 0 : i64, tpu.core_type = #tpu.core_type<tc>, window_params = [{transform_indices = @transform_0, window_bounds = array<i64: 2, 128>}, {transform_indices = @transform_1, window_bounds = array<i64: 2, 128>}]} {
    %c0 = arith.constant 0 : index
    %c0_0 = arith.constant 0 : index
    %0 = vector.load %arg1[%c0, %c0_0] : memref<2x128xf32, #tpu.memory_space<vmem>>, vector<2x128xf32>
    %cst = arith.constant dense<0xFF800000> : vector<2xf32>
    %1 = vector.multi_reduction <maximumf>, %0, %cst [1] : vector<2x128xf32> to vector<2xf32>
    %2 = vector.shape_cast %1 : vector<2xf32> to vector<2x1xf32>
    %3 = vector.broadcast %2 : vector<2x1xf32> to vector<2x128xf32>
    %4 = arith.subf %0, %3 : vector<2x128xf32>
    %5 = math.exp %4 : vector<2x128xf32>
    %cst_1 = arith.constant dense<0.000000e+00> : vector<2xf32>
    %6 = vector.multi_reduction <add>, %5, %cst_1 [1] : vector<2x128xf32> to vector<2xf32>
    %7 = vector.shape_cast %6 : vector<2xf32> to vector<2x1xf32>
    %8 = math.log %7 : vector<2x1xf32>
    %9 = vector.broadcast %8 : vector<2x1xf32> to vector<2x128xf32>
    %10 = arith.subf %4, %9 : vector<2x128xf32>
    %c0_2 = arith.constant 0 : index
    %c0_3 = arith.constant 0 : index
    %11 = vector.load %arg2[%c0_2, %c0_3] : memref<2x128xf32, #tpu.memory_space<vmem>>, vector<2x128xf32>
    tpu.vector_store %arg2[%c0_2, %c0_3], %10 {strides = array<i32>} : memref<2x128xf32, #tpu.memory_space<vmem>>, vector<2x128xf32>,
    return
  }
  func.func @transform_0(%arg0: i32) -> (i32, i32) {
    %c0_i32 = arith.constant 0 : i32
    %c0_i32_0 = arith.constant 0 : i32
    return %arg0, %c0_i32 : i32, i32
  }
  func.func @transform_1(%arg0: i32) -> (i32, i32) {
    %c0_i32 = arith.constant 0 : i32
    %c0_i32_0 = arith.constant 0 : i32
    return %arg0, %c0_i32 : i32, i32
  }
}

</mosaic_0001>

<llo_original>
// kernel: tpu_custom_call.1
$region0: #{tpu_custom_call.1}
  #allocation0 [shape = 'u32[]', space=smem, size = 0x4, offset = 0x4, fixed_abs, tag = 'smem constant byte address 0x4 - core index']
  #allocation1 [shape = 'u32[72,128]{1,0:T(1,128)}', space=vmem, size = 0x9000, scoped, tag = 'internal scratch']
  %s0 = inlined_call_operand.hbm [shape: f32[2,128], index: 0, kind: input, shape index: {}]
  %s1 = inlined_call_operand.hbm [shape: f32[2,128], index: 1, kind: output, shape index: {}]
  %s2 = sld [smem:[#allocation0]]
  $region18: #{tpu_custom_call.1} parent=0
    _
  %s4 = ssub.s32 1, %s2
  %s5 = scalar_select 0, %s4, %s2
  $region1: #{tpu_custom_call.1} parent=0
    #allocation2 [shape = 'u8[1024]{0}', space=vmem, size = 0x400, scoped, tag = 'input window, operand 0, single buffered']
    #allocation3 [shape = 's32[1]{0}', space=sflag, size = 0x4, scoped, tag = 'scoped memory for tpu_custom_call.1']
    #allocation4 [shape = 's32[1]{0}', space=sflag, size = 0x4, scoped, tag = 'scoped memory for tpu_custom_call.1']
    #allocation5 [shape = 'u8[1024]{0}', space=vmem, size = 0x400, scoped, tag = 'output window, operand 0, single buffered']
    %6 = vsyncpa [#allocation3], 0
    %7 = vsyncpa [#allocation4], 0
    // Predicated region
    $region2: #{tpu_custom_call.1} parent=1 // pred_check
      _
    $region3: #{tpu_custom_call.1} parent=1 // pred_check_branch
      %9 = sbr.rel (0) target = $region5
    $region4: #{tpu_custom_call.1} parent=1 // pred_region
      %11 = vsyncadd [#allocation3], 0
      %s13 = sshll.u32 %s0, 4
      %s14 = int_to_ptr.hbm [resolvable:$true] %s13
      %s15 = sshll.u32 [#allocation2], 4
      %s16 = int_to_ptr.vmem [resolvable:$true] %s15
      %18 = dma.hbm_to_vmem [thread:$0]  %s14, 32, %s16, [#allocation3]
    $region5: #{tpu_custom_call.1} parent=1 // pred_fallthru
      _
    // Predicated region
    $region6: #{tpu_custom_call.1} parent=1 // pred_check
      _
    $region7: #{tpu_custom_call.1} parent=1 // pred_check_branch
      %20 = sbr.rel (0) target = $region9
    $region8: #{tpu_custom_call.1} parent=1 // pred_region
      %22 = dma.done [#allocation3], 32
    $region9: #{tpu_custom_call.1} parent=1 // pred_fallthru
      _
    %v23 = vld [vmem:[#allocation2] sm:$0x3]
    %vm24 = vcmask 1041408
    %v25 = vsel %vm24, %v23, -inf
    %26 = vmax.xlane.f32.xlu0 %v25
    %v27 = vpop.xlane.xlu0 %26
    %v28 = vsub.f32 %v23, %v27
    %v29 = vmul.f32 %v28, 1.442695
    %v30 = vpow.pop %v29
    %v31 = vsel %vm24, %v30, 0.0
    %32 = vadd.xlane.f32.xlu0 %v31
    %v33 = vpop.xlane.xlu0 %32
    %v34 = vlog2.pop %v33
    %v35 = vmul.f32 %v34, 0.6931472
    %v36 = vsub.f32 %v28, %v35
    %37 = vst [vmem:[#allocation5] sm:$0x3] %v36
    // Predicated region
    $region10: #{tpu_custom_call.1} parent=1 // pred_check
      _
    $region11: #{tpu_custom_call.1} parent=1 // pred_check_branch
      %39 = sbr.rel (0) target = $region13
    $region12: #{tpu_custom_call.1} parent=1 // pred_region
      %41 = vsyncadd [#allocation4], 0
      %s43 = sshll.u32 [#allocation5], 4
      %s44 = int_to_ptr.vmem [resolvable:$true] %s43
      %s45 = sshll.u32 %s1, 4
      %s46 = int_to_ptr.hbm [resolvable:$true] %s45
      %48 = dma.vmem_to_hbm [thread:$0]  %s44, 32, %s46, [#allocation4]
    $region13: #{tpu_custom_call.1} parent=1 // pred_fallthru
      _
    // Predicated region
    $region14: #{tpu_custom_call.1} parent=1 // pred_check
      _
    $region15: #{tpu_custom_call.1} parent=1 // pred_check_branch
      %50 = sbr.rel (0) target = $region17
    $region16: #{tpu_custom_call.1} parent=1 // pred_region
      %52 = dma.done [#allocation4], 32
    $region17: #{tpu_custom_call.1} parent=1 // pred_fallthru
      _
    %53 = vsyncpa [#allocation3], 1
    %54 = vsyncpa [#allocation4], 1

</llo_original>
